<compile_context>
chip_gen: v5e
topology: v5e:2x2
jax: 0.10.0
libtpu: 0.0.40
codegen_flags: <defaults>
</compile_context>

<pallas_src>
import jax
import jax.numpy as jnp
from jax.experimental import pallas as pl
from jax.experimental.pallas import tpu as pltpu


_QP_B_EQUALS_AX = True
# TODO(synk): if b(x) != A(x) x is ever needed, implement the closed-form
#             equality-constrained correction in the wrapper (no generic QP
#             solver is required for this 2-constraint structure).


def _probe_weight_pipeline_mode():
    """Import-time capability check: does this JAX build accept
    pipeline_mode=pl.Buffered(1) on BlockSpec?  Probed on a dedicated tiny copy
    kernel so genuine compile errors of the real kernel are never masked."""
    try:
        mode = pl.Buffered(1)
        spec = pl.BlockSpec((8, 128), lambda i: (0, 0), pipeline_mode=mode)

        def _copy(a_ref, o_ref):
            o_ref[...] = a_ref[...]

        fn = pl.pallas_call(
            _copy,
            out_shape=jax.ShapeDtypeStruct((8, 128), jnp.float32),
            grid_spec=pltpu.PrefetchScalarGridSpec(
                num_scalar_prefetch=0,
                grid=(1,),
                in_specs=[spec],
                out_specs=pl.BlockSpec((8, 128), lambda i: (0, 0)),
            ),
        )
        jax.jit(fn).lower(jax.ShapeDtypeStruct((8, 128), jnp.float32))
        return mode
    except Exception:
        return None


_WEIGHT_PIPELINE_MODE = _probe_weight_pipeline_mode()


def _ball_ball_kernel(x_ref, w1_ref, w2_ref, w4_ref, bias_ref, o_ref):
    H = w1_ref.shape[1]
    C = w4_ref.shape[1]

    # QP solution z == x (see _QP_B_EQUALS_AX note); cast once to bf16 for the MXU.
    z = x_ref[...].astype(jnp.bfloat16)                              # (TB, F)

    # Biases packed into one (1, 2H + C) f32 buffer (one DMA instead of three);
    # static slices of the VMEM ref are effectively free.
    b1 = bias_ref[:, 0:H]
    b2 = bias_ref[:, H:2 * H]
    b4 = bias_ref[:, 2 * H:2 * H + C]

    # Fused MLP head: relu(fc1) -> relu(fc2) -> fc4.  bf16 operands, f32 accumulate.
    h1 = jnp.maximum(
        jnp.dot(z, w1_ref[...], preferred_element_type=jnp.float32) + b1, 0.0)
    h2 = jnp.maximum(
        jnp.dot(h1.astype(jnp.bfloat16), w2_ref[...],
                preferred_element_type=jnp.float32) + b2, 0.0)
    # TODO(synk): if batch ever grows large, stage the (TB, 8) result through a
    #             128-lane-wide scratch for an unmasked lane-dense store.
    o_ref[...] = (
        jnp.dot(h2.astype(jnp.bfloat16), w4_ref[...],
                preferred_element_type=jnp.float32) + b4)


def _pick_batch_tile(B):
    # Single grid step for small/typical B: weights are fetched exactly once and
    # stay resident.  Only tile at MXU-friendly 256-row granularity for large B;
    # the batch axis stays "arbitrary" so a megacore split never duplicates the
    # full weight DMA on both v7x TensorCores of this weight-HBM-bound kernel.
    if B > 256 and B % 256 == 0:
        return 256
    return B


def _vmem_limit_bytes(F, H, C, TB, weight_bufs):
    weights = (F * H + H * H + H * C) * 2 * weight_bufs        # bf16 weights
    bias = (2 * H + C) * 4 * weight_bufs                       # packed f32 biases
    io = (TB * F + TB * C) * 4 * 2                             # x / out, 2 buffers
    inter = TB * H * 4 * 3                                     # h1 / h2 temporaries
    total = weights + bias + io + inter
    return int(min(max(total * 1.5, 8 * 1024 * 1024), 64 * 1024 * 1024))


def _make_call(B, F, H, C, TB):
    wkw = ({} if _WEIGHT_PIPELINE_MODE is None
           else {"pipeline_mode": _WEIGHT_PIPELINE_MODE})
    weight_bufs = 1 if _WEIGHT_PIPELINE_MODE is not None else 2
    const = lambda i: (0, 0)
    return pl.pallas_call(
        _ball_ball_kernel,
        out_shape=jax.ShapeDtypeStruct((B, C), jnp.float32),
        grid_spec=pltpu.PrefetchScalarGridSpec(
            num_scalar_prefetch=0,
            grid=(B // TB,),
            in_specs=[
                pl.BlockSpec((TB, F), lambda i: (i, 0)),             # x
                pl.BlockSpec((F, H), const, **wkw),                  # w1 (grid-invariant)
                pl.BlockSpec((H, H), const, **wkw),                  # w2
                pl.BlockSpec((H, C), const, **wkw),                  # w4
                pl.BlockSpec((1, 2 * H + C), const, **wkw),          # packed biases
            ],
            out_specs=pl.BlockSpec((TB, C), lambda i: (i, 0)),
        ),
        compiler_params=pltpu.CompilerParams(
            # Sequential batch steps: never duplicate grid-invariant weight DMAs
            # across cores; 1x weight bytes keeps us at the weight-DMA roofline.
            dimension_semantics=("arbitrary",),
            vmem_limit_bytes=_vmem_limit_bytes(F, H, C, TB, weight_bufs),
        ),
    )


def prepare_params(params):
    """ONE-TIME parameter preparation (call at parameter-load time, not per step):
    casts weights to bf16 (native MXU dtype, halves weight HBM bytes) and packs
    the three biases into a single f32 row.  params = (w1, b1, w2, b2, w4, b4),
    weights stored as (in, out)."""
    w1, b1, w2, b2, w4, b4 = params
    w1 = jnp.asarray(w1, jnp.bfloat16)
    w2 = jnp.asarray(w2, jnp.bfloat16)
    w4 = jnp.asarray(w4, jnp.bfloat16)
    bias = jnp.concatenate(
        [jnp.asarray(b1, jnp.float32).reshape(1, -1),
         jnp.asarray(b2, jnp.float32).reshape(1, -1),
         jnp.asarray(b4, jnp.float32).reshape(1, -1)], axis=1)
    return (w1, w2, w4, bias)


@jax.jit
def ball_ball_update_opt_net(x, prepared_params):
    """Forward pass.  x: (B, nFeatures) f32; prepared_params from prepare_params()."""
    if not _QP_B_EQUALS_AX:
        raise NotImplementedError(
            "z == x shortcut requires b(x) == A(x) x (see module header).")
    w1, w2, w4, bias = prepared_params
    B, F = x.shape
    H = w1.shape[1]
    C = w4.shape[1]
    TB = _pick_batch_tile(B)
    # TODO(synk): at the tiny shipped shapes (H~256, B=8) a plain XLA dot chain may
    #             match this kernel; keep Pallas for the nHidden=2000 config where
    #             fusing all three layers avoids intermediate HBM round trips.
    return _make_call(B, F, H, C, TB)(x, w1, w2, w4, bias)


def _init_linear(kw, kb, fan_in, fan_out):
    # Mirrors nn.Linear default init: U(-1/sqrt(fan_in), 1/sqrt(fan_in)).
    lim = 1.0 / float(fan_in) ** 0.5
    w = jax.random.uniform(kw, (fan_in, fan_out), jnp.float32, -lim, lim)
    b = jax.random.uniform(kb, (1, fan_out), jnp.float32, -lim, lim)
    return w, b


def _qp_closed_form(x):
    """Reference closed-form solution of the module's equality-constrained QP."""
    zeros = jnp.zeros_like(x[:, 0])
    ones = jnp.ones_like(x[:, 0])
    row0 = jnp.stack([zeros, zeros, zeros, zeros, x[:, 3], ones, zeros, zeros], axis=1)
    row1 = jnp.stack([zeros, zeros, zeros, zeros, zeros, zeros, x[:, 3], ones], axis=1)
    A = jnp.stack([row0, row1], axis=1)                               # (B, 2, 8)
    b = jnp.stack((x[:, 3] * x[:, 4] + x[:, 5],
                   x[:, 3] * x[:, 6] + x[:, 7]), axis=1)              # (B, 2)
    resid = jnp.einsum('bij,bj->bi', A, x) - b
    AAt = jnp.einsum('bij,bkj->bik', A, A)
    lam = jnp.linalg.solve(AAt, resid[..., None])[..., 0]
    return x - jnp.einsum('bij,bi->bj', A, lam)


if __name__ == "__main__":
    # nFeatures/nCls are fixed at 8 by the forward's hard-coded column indexing;
    # hidden shrunk from 2000 -> 256 for a small, fast self-test.
    nFeatures, nHidden, nCls = 8, 256, 8
    B = 8

    key = jax.random.PRNGKey(0)
    ks = jax.random.split(key, 7)
    w1, b1 = _init_linear(ks[0], ks[1], nFeatures, nHidden)   # fc1
    w2, b2 = _init_linear(ks[2], ks[3], nHidden, nHidden)     # fc2
    w4, b4 = _init_linear(ks[4], ks[5], nHidden, nCls)        # fc4
    x = jax.random.normal(ks[6], (B, nFeatures), jnp.float32)

    prepared = prepare_params((w1, b1, w2, b2, w4, b4))        # one-time prep
    out = jax.block_until_ready(ball_ball_update_opt_net(x, prepared))

    # Pure-JAX reference: true QP closed form (reduces to z == x since b = A x),
    # then the MLP with the same bf16-operand / f32-accumulate numerics.
    z = _qp_closed_form(x)
    assert jnp.allclose(z, x, atol=1e-5), "QP closed form should reduce to z == x"
    zb = z.astype(jnp.bfloat16)
    w1b, w2b, w4b = (w.astype(jnp.bfloat16) for w in (w1, w2, w4))
    h1 = jnp.maximum(jnp.dot(zb, w1b, preferred_element_type=jnp.float32) + b1, 0.0)
    h2 = jnp.maximum(
        jnp.dot(h1.astype(jnp.bfloat16), w2b, preferred_element_type=jnp.float32) + b2,
        0.0)
    ref = jnp.dot(h2.astype(jnp.bfloat16), w4b, preferred_element_type=jnp.float32) + b4

    assert out.shape == (B, nCls)
    assert jnp.allclose(out, ref, atol=1e-2, rtol=1e-2), "mismatch vs reference"
    print("KERNEL_OK")
</pallas_src>

<mosaic_0001>
module attributes {stable_mosaic.version = 11 : i64} {
  func.func @_ball_ball_kernel(%arg0: i32, %arg1: memref<8x8xf32, #tpu.memory_space<vmem>>, %arg2: memref<8x256xbf16, #tpu.memory_space<vmem>>, %arg3: memref<256x256xbf16, #tpu.memory_space<vmem>>, %arg4: memref<256x8xbf16, #tpu.memory_space<vmem>>, %arg5: memref<1x520xf32, #tpu.memory_space<vmem>>, %arg6: memref<8x8xf32, #tpu.memory_space<vmem>>) attributes {dimension_semantics = [#tpu.dimension_semantics<arbitrary>], iteration_bounds = array<i64: 1>, scalar_prefetch = 0 : i64, scratch_operands = 0 : i64, tpu.core_type = #tpu.core_type<tc>, window_params = [{transform_indices = @transform_0, window_bounds = array<i64: 8, 8>}, {pipeline_mode = #tpu.pipeline_mode<synchronous>, transform_indices = @transform_1, window_bounds = array<i64: 8, 256>}, {pipeline_mode = #tpu.pipeline_mode<synchronous>, transform_indices = @transform_2, window_bounds = array<i64: 256, 256>}, {pipeline_mode = #tpu.pipeline_mode<synchronous>, transform_indices = @transform_3, window_bounds = array<i64: 256, 8>}, {pipeline_mode = #tpu.pipeline_mode<synchronous>, transform_indices = @transform_4, window_bounds = array<i64: 1, 520>}, {transform_indices = @transform_5, window_bounds = array<i64: 8, 8>}]} {
    %c0 = arith.constant 0 : index
    %c0_0 = arith.constant 0 : index
    %0 = vector.load %arg1[%c0, %c0_0] : memref<8x8xf32, #tpu.memory_space<vmem>>, vector<8x8xf32>
    %1 = arith.truncf %0 : vector<8x8xf32> to vector<8x8xbf16>
    %c0_1 = arith.constant 0 : index
    %c0_2 = arith.constant 0 : index
    %2 = vector.load %arg5[%c0_1, %c0_2] : memref<1x520xf32, #tpu.memory_space<vmem>>, vector<1x256xf32>
    %c0_3 = arith.constant 0 : index
    %c256 = arith.constant 256 : index
    %3 = vector.load %arg5[%c0_3, %c256] : memref<1x520xf32, #tpu.memory_space<vmem>>, vector<1x256xf32>
    %c0_4 = arith.constant 0 : index
    %c512 = arith.constant 512 : index
    %4 = vector.load %arg5[%c0_4, %c512] : memref<1x520xf32, #tpu.memory_space<vmem>>, vector<1x8xf32>
    %c0_5 = arith.constant 0 : index
    %c0_6 = arith.constant 0 : index
    %5 = vector.load %arg2[%c0_5, %c0_6] : memref<8x256xbf16, #tpu.memory_space<vmem>>, vector<8x256xbf16>
    %cst = arith.constant dense<0.000000e+00> : vector<8x256xf32>
    %6 = tpu.matmul %1, %5, %cst {dimension_numbers = #tpu.dot_dimension_numbers<[1], [0], [0], [1], [0, 0, 1, 1], [], []>} : vector<8x8xbf16>, vector<8x256xbf16>, vector<8x256xf32> -> vector<8x256xf32>
    %7 = vector.broadcast %2 : vector<1x256xf32> to vector<8x256xf32>
    %8 = arith.addf %6, %7 : vector<8x256xf32>
    %cst_7 = arith.constant 0.000000e+00 : f32
    %9 = vector.broadcast %cst_7 : f32 to vector<8x256xf32>
    %10 = arith.maximumf %8, %9 : vector<8x256xf32>
    %11 = arith.truncf %10 : vector<8x256xf32> to vector<8x256xbf16>
    %c0_8 = arith.constant 0 : index
    %c0_9 = arith.constant 0 : index
    %12 = vector.load %arg3[%c0_8, %c0_9] : memref<256x256xbf16, #tpu.memory_space<vmem>>, vector<256x256xbf16>
    %cst_10 = arith.constant dense<0.000000e+00> : vector<8x256xf32>
    %13 = tpu.matmul %11, %12, %cst_10 {dimension_numbers = #tpu.dot_dimension_numbers<[1], [0], [0], [1], [0, 0, 1, 1], [], []>} : vector<8x256xbf16>, vector<256x256xbf16>, vector<8x256xf32> -> vector<8x256xf32>
    %14 = vector.broadcast %3 : vector<1x256xf32> to vector<8x256xf32>
    %15 = arith.addf %13, %14 : vector<8x256xf32>
    %cst_11 = arith.constant 0.000000e+00 : f32
    %16 = vector.broadcast %cst_11 : f32 to vector<8x256xf32>
    %17 = arith.maximumf %15, %16 : vector<8x256xf32>
    %18 = arith.truncf %17 : vector<8x256xf32> to vector<8x256xbf16>
    %c0_12 = arith.constant 0 : index
    %c0_13 = arith.constant 0 : index
    %19 = vector.load %arg4[%c0_12, %c0_13] : memref<256x8xbf16, #tpu.memory_space<vmem>>, vector<256x8xbf16>
    %cst_14 = arith.constant dense<0.000000e+00> : vector<8x8xf32>
    %20 = tpu.matmul %18, %19, %cst_14 {dimension_numbers = #tpu.dot_dimension_numbers<[1], [0], [0], [1], [0, 0, 1, 1], [], []>} : vector<8x256xbf16>, vector<256x8xbf16>, vector<8x8xf32> -> vector<8x8xf32>
    %21 = vector.broadcast %4 : vector<1x8xf32> to vector<8x8xf32>
    %22 = arith.addf %20, %21 : vector<8x8xf32>
    %c0_15 = arith.constant 0 : index
    %c0_16 = arith.constant 0 : index
    %23 = vector.load %arg6[%c0_15, %c0_16] : memref<8x8xf32, #tpu.memory_space<vmem>>, vector<8x8xf32>
    tpu.vector_store %arg6[%c0_15, %c0_16], %22 {strides = array<i32>} : memref<8x8xf32, #tpu.memory_space<vmem>>, vector<8x8xf32>,
    return
  }
  func.func @transform_0(%arg0: i32) -> (i32, i32) {
    %c0_i32 = arith.constant 0 : i32
    %c0_i32_0 = arith.constant 0 : i32
    return %arg0, %c0_i32 : i32, i32
  }
  func.func @transform_1(%arg0: i32) -> (i32, i32) {
    %c0_i32 = arith.constant 0 : i32
    %c0_i32_0 = arith.constant 0 : i32
    %c0_i32_1 = arith.constant 0 : i32
    return %c0_i32, %c0_i32_0 : i32, i32
  }
  func.func @transform_2(%arg0: i32) -> (i32, i32) {
    %c0_i32 = arith.constant 0 : i32
    %c0_i32_0 = arith.constant 0 : i32
    %c0_i32_1 = arith.constant 0 : i32
    return %c0_i32, %c0_i32_0 : i32, i32
  }
  func.func @transform_3(%arg0: i32) -> (i32, i32) {
    %c0_i32 = arith.constant 0 : i32
    %c0_i32_0 = arith.constant 0 : i32
    %c0_i32_1 = arith.constant 0 : i32
    return %c0_i32, %c0_i32_0 : i32, i32
  }
  func.func @transform_4(%arg0: i32) -> (i32, i32) {
    %c0_i32 = arith.constant 0 : i32
    %c0_i32_0 = arith.constant 0 : i32
    %c0_i32_1 = arith.constant 0 : i32
    return %c0_i32, %c0_i32_0 : i32, i32
  }
  func.func @transform_5(%arg0: i32) -> (i32, i32) {
    %c0_i32 = arith.constant 0 : i32
    %c0_i32_0 = arith.constant 0 : i32
    return %arg0, %c0_i32 : i32, i32
  }
}

</mosaic_0001>

<llo_original>
// kernel: ball_ball_update_opt_net.1
$region0: #{ball_ball_update_opt_net.1}
  #allocation0 [shape = 'u32[]', space=smem, size = 0x4, offset = 0x4, fixed_abs, tag = 'smem constant byte address 0x4 - core index']
  #allocation1 [shape = 'u32[72,128]{1,0:T(1,128)}', space=vmem, size = 0x9000, scoped, tag = 'internal scratch']
  %s0 = inlined_call_operand.vmem [shape: f32[8,8], index: 0, kind: input, shape index: {}]
  %s1 = inlined_call_operand.vmem [shape: bf16[8,256], index: 1, kind: input, shape index: {}]
  %s2 = inlined_call_operand.hbm [shape: bf16[256,256], index: 2, kind: input, shape index: {}]
  %s3 = inlined_call_operand.vmem [shape: bf16[256,8], index: 3, kind: input, shape index: {}]
  %s4 = inlined_call_operand.vmem [shape: f32[1,520], index: 4, kind: input, shape index: {}]
  %s5 = inlined_call_operand.hbm [shape: f32[8,8], index: 5, kind: output, shape index: {}]
  %s6 = sld [smem:[#allocation0]]
  $region34: #{ball_ball_update_opt_net.1} parent=0
    _
  %s8 = ssub.s32 1, %s6
  %s9 = scalar_select 0, %s8, %s6
  $region1: #{ball_ball_update_opt_net.1} parent=0
    #allocation2 [shape = 'u8[131072]{0}', space=vmem, size = 0x20000, scoped, tag = 'input window, operand 2, single buffered']
    #allocation3 [shape = 's32[1]{0}', space=sflag, size = 0x4, scoped, tag = 'scoped memory for ball_ball_update_opt_net.1']
    #allocation4 [shape = 's32[1]{0}', space=sflag, size = 0x4, scoped, tag = 'scoped memory for ball_ball_update_opt_net.1']
    #allocation5 [shape = 'u8[4096]{0}', space=vmem, size = 0x1000, scoped, tag = 'output window, operand 0, single buffered']
    %10 = vsyncpa [#allocation3], 0
    %11 = vsyncpa [#allocation4], 0
    // Predicated region
    $region2: #{ball_ball_update_opt_net.1} parent=1 // pred_check
      _
    $region3: #{ball_ball_update_opt_net.1} parent=1 // pred_check_branch
      %13 = sbr.rel (0) target = $region5
    $region4: #{ball_ball_update_opt_net.1} parent=1 // pred_region
      _
    $region5: #{ball_ball_update_opt_net.1} parent=1 // pred_fallthru
      _
    // Predicated region
    $region6: #{ball_ball_update_opt_net.1} parent=1 // pred_check
      _
    $region7: #{ball_ball_update_opt_net.1} parent=1 // pred_check_branch
      %15 = sbr.rel (0) target = $region9
    $region8: #{ball_ball_update_opt_net.1} parent=1 // pred_region
      _
    $region9: #{ball_ball_update_opt_net.1} parent=1 // pred_fallthru
      _
    // Predicated region
    $region10: #{ball_ball_update_opt_net.1} parent=1 // pred_check
      _
    $region11: #{ball_ball_update_opt_net.1} parent=1 // pred_check_branch
      %17 = sbr.rel (0) target = $region13
    $region12: #{ball_ball_update_opt_net.1} parent=1 // pred_region
      %19 = vsyncadd [#allocation3], 0
      %s20 = sshll.u32 %s2, 4
      %s21 = int_to_ptr.hbm [resolvable:$true] %s20
      %s22 = sshll.u32 [#allocation2], 4
      %s23 = int_to_ptr.vmem [resolvable:$true] %s22
      %28 = dma.hbm_to_vmem [thread:$0]  %s21, 4096, %s23, [#allocation3], 128, 128, 8
    $region13: #{ball_ball_update_opt_net.1} parent=1 // pred_fallthru
      _
    // Predicated region
    $region14: #{ball_ball_update_opt_net.1} parent=1 // pred_check
      _
    $region15: #{ball_ball_update_opt_net.1} parent=1 // pred_check_branch
      %30 = sbr.rel (0) target = $region17
    $region16: #{ball_ball_update_opt_net.1} parent=1 // pred_region
      _
    $region17: #{ball_ball_update_opt_net.1} parent=1 // pred_fallthru
      _
    // Predicated region
    $region18: #{ball_ball_update_opt_net.1} parent=1 // pred_check
      _
    $region19: #{ball_ball_update_opt_net.1} parent=1 // pred_check_branch
      %32 = sbr.rel (0) target = $region21
    $region20: #{ball_ball_update_opt_net.1} parent=1 // pred_region
      _
    $region21: #{ball_ball_update_opt_net.1} parent=1 // pred_fallthru
      _
    // Predicated region
    $region22: #{ball_ball_update_opt_net.1} parent=1 // pred_check
      _
    $region23: #{ball_ball_update_opt_net.1} parent=1 // pred_check_branch
      %34 = sbr.rel (0) target = $region25
    $region24: #{ball_ball_update_opt_net.1} parent=1 // pred_region
      %36 = dma.done [#allocation3], 4096
    $region25: #{ball_ball_update_opt_net.1} parent=1 // pred_fallthru
      _
    %v38 = vld [vmem:[%s0] sm:$0xff]
    %v39 = vpack.c.bf16 %v38, %v38
    %v40 = vld [vmem:[%s4] sm:$0x3]
    %v41 = vld [vmem:[%s4 + $0x2] sm:$0x3]
    %v42 = vld [vmem:[%s4 + $0x4] sm:$0x1]
    %v43 = vld [vmem:[%s1] sm:$0xff]
    %v45 = vperm.slane %v40, 0
    %v46 = vperm.slane %v40, 1
    %v50 = vunpack.c.l.b16 %v43
    %v51 = vunpack.c.h.b16 %v43
    %v52 = vpack.c.b16 %v50, %v50
    %v53 = vpack.c.b16 %v51, %v51
    %vm54 = vcmask 64512
    %v56 = vsel %vm54, %v39, 0
    %vm58 = vcmask 1043456
    %v60 = vsel %vm58, %v52, 0
    %v63 = vsel %vm58, %v53, 0
    %65 = vmatpush.bf16.msra.mxu0 0
    %66 = vmatpush.bf16.msra.mxu0 0
    %67 = vmatpush.bf16.msra.mxu0 0
    %68 = vmatpush.bf16.msra.mxu0 0
    %69 = vmatpush.bf16.msra.mxu0 0
    %70 = vmatpush.bf16.msra.mxu0 0
    %71 = vmatpush.bf16.msra.mxu0 0
    %72 = vmatpush.bf16.msra.mxu0 %v60
    %73 = vmatmul.bf16.gmra.mxu0 %v56
    %v74 = vpop.f32.mrf.mxu0
    %v75 = vadd.f32 %v45, %v74
    %v76 = vpop.f32.mrf.mxu0
    %77 = vdwg.mxu0
    %78 = vmatpush.bf16.msra.mxu0 0
    %79 = vmatpush.bf16.msra.mxu0 0
    %80 = vmatpush.bf16.msra.mxu0 0
    %81 = vmatpush.bf16.msra.mxu0 0
    %82 = vmatpush.bf16.msra.mxu0 0
    %83 = vmatpush.bf16.msra.mxu0 0
    %84 = vmatpush.bf16.msra.mxu0 0
    %85 = vmatpush.bf16.msra.mxu0 %v63
    %86 = vmatmul.bf16.gmra.mxu0 %v56
    %v87 = vpop.f32.mrf.mxu0
    %v88 = vadd.f32 %v46, %v87
    %v89 = vpop.f32.mrf.mxu0
    %90 = vdwg.mxu0
    %v91 = vmax.f32 %v75, 0.0
    %v92 = vmax.f32 %v88, 0.0
    %v93 = vpack.c.bf16 %v91, %v91
    %v94 = vpack.c.bf16 %v92, %v92
    %v95 = vld [vmem:[#allocation2] sm:$0xff]
    %v96 = vld [vmem:[#allocation2 + $0x8] sm:$0xff]
    %v97 = vld [vmem:[#allocation2 + $0x10] sm:$0xff]
    %v98 = vld [vmem:[#allocation2 + $0x18] sm:$0xff]
    %v99 = vld [vmem:[#allocation2 + $0x20] sm:$0xff]
    %v100 = vld [vmem:[#allocation2 + $0x28] sm:$0xff]
    %v101 = vld [vmem:[#allocation2 + $0x30] sm:$0xff]
    %v102 = vld [vmem:[#allocation2 + $0x38] sm:$0xff]
    %v103 = vld [vmem:[#allocation2 + $0x40] sm:$0xff]
    %v104 = vld [vmem:[#allocation2 + $0x48] sm:$0xff]
    %v105 = vld [vmem:[#allocation2 + $0x50] sm:$0xff]
    %v106 = vld [vmem:[#allocation2 + $0x58] sm:$0xff]
    %v107 = vld [vmem:[#allocation2 + $0x60] sm:$0xff]
    %v108 = vld [vmem:[#allocation2 + $0x68] sm:$0xff]
    %v109 = vld [vmem:[#allocation2 + $0x70] sm:$0xff]
    %v110 = vld [vmem:[#allocation2 + $0x78] sm:$0xff]
    %v111 = vld [vmem:[#allocation2 + $0x80] sm:$0xff]
    %v112 = vld [vmem:[#allocation2 + $0x88] sm:$0xff]
    %v113 = vld [vmem:[#allocation2 + $0x90] sm:$0xff]
    %v114 = vld [vmem:[#allocation2 + $0x98] sm:$0xff]
    %v115 = vld [vmem:[#allocation2 + $0xa0] sm:$0xff]
    %v116 = vld [vmem:[#allocation2 + $0xa8] sm:$0xff]
    %v117 = vld [vmem:[#allocation2 + $0xb0] sm:$0xff]
    %v118 = vld [vmem:[#allocation2 + $0xb8] sm:$0xff]
    %v119 = vld [vmem:[#allocation2 + $0xc0] sm:$0xff]
    %v120 = vld [vmem:[#allocation2 + $0xc8] sm:$0xff]
    %v121 = vld [vmem:[#allocation2 + $0xd0] sm:$0xff]
    %v122 = vld [vmem:[#allocation2 + $0xd8] sm:$0xff]
    %v123 = vld [vmem:[#allocation2 + $0xe0] sm:$0xff]
    %v124 = vld [vmem:[#allocation2 + $0xe8] sm:$0xff]
    %v125 = vld [vmem:[#allocation2 + $0xf0] sm:$0xff]
    %v126 = vld [vmem:[#allocation2 + $0xf8] sm:$0xff]
    %v128 = vperm.slane %v41, 0
    %v129 = vperm.slane %v41, 1
    %v164 = vunpack.c.l.b16 %v95
    %v165 = vunpack.c.h.b16 %v95
    %v166 = vunpack.c.l.b16 %v96
    %v167 = vunpack.c.h.b16 %v96
    %v168 = vunpack.c.l.b16 %v97
    %v169 = vunpack.c.h.b16 %v97
    %v170 = vunpack.c.l.b16 %v98
    %v171 = vunpack.c.h.b16 %v98
    %v172 = vunpack.c.l.b16 %v99
    %v173 = vunpack.c.h.b16 %v99
    %v174 = vunpack.c.l.b16 %v100
    %v175 = vunpack.c.h.b16 %v100
    %v176 = vunpack.c.l.b16 %v101
    %v177 = vunpack.c.h.b16 %v101
    %v178 = vunpack.c.l.b16 %v102
    %v179 = vunpack.c.h.b16 %v102
    %v180 = vunpack.c.l.b16 %v103
    %v181 = vunpack.c.h.b16 %v103
    %v182 = vunpack.c.l.b16 %v104
    %v183 = vunpack.c.h.b16 %v104
    %v184 = vunpack.c.l.b16 %v105
    %v185 = vunpack.c.h.b16 %v105
    %v186 = vunpack.c.l.b16 %v106
    %v187 = vunpack.c.h.b16 %v106
    %v188 = vunpack.c.l.b16 %v107
    %v189 = vunpack.c.h.b16 %v107
    %v190 = vunpack.c.l.b16 %v108
    %v191 = vunpack.c.h.b16 %v108
    %v192 = vunpack.c.l.b16 %v109
    %v193 = vunpack.c.h.b16 %v109
    %v194 = vunpack.c.l.b16 %v110
    %v195 = vunpack.c.h.b16 %v110
    %v196 = vunpack.c.l.b16 %v111
    %v197 = vunpack.c.h.b16 %v111
    %v198 = vunpack.c.l.b16 %v112
    %v199 = vunpack.c.h.b16 %v112
    %v200 = vunpack.c.l.b16 %v113
    %v201 = vunpack.c.h.b16 %v113
    %v202 = vunpack.c.l.b16 %v114
    %v203 = vunpack.c.h.b16 %v114
    %v204 = vunpack.c.l.b16 %v115
    %v205 = vunpack.c.h.b16 %v115
    %v206 = vunpack.c.l.b16 %v116
    %v207 = vunpack.c.h.b16 %v116
    %v208 = vunpack.c.l.b16 %v117
    %v209 = vunpack.c.h.b16 %v117
    %v210 = vunpack.c.l.b16 %v118
    %v211 = vunpack.c.h.b16 %v118
    %v212 = vunpack.c.l.b16 %v119
    %v213 = vunpack.c.h.b16 %v119
    %v214 = vunpack.c.l.b16 %v120
    %v215 = vunpack.c.h.b16 %v120
    %v216 = vunpack.c.l.b16 %v121
    %v217 = vunpack.c.h.b16 %v121
    %v218 = vunpack.c.l.b16 %v122
    %v219 = vunpack.c.h.b16 %v122
    %v220 = vunpack.c.l.b16 %v123
    %v221 = vunpack.c.h.b16 %v123
    %v222 = vunpack.c.l.b16 %v124
    %v223 = vunpack.c.h.b16 %v124
    %v224 = vunpack.c.l.b16 %v125
    %v225 = vunpack.c.h.b16 %v125
    %v226 = vunpack.c.l.b16 %v126
    %v227 = vunpack.c.h.b16 %v126
    %v228 = vpack.c.b16 %v166, %v164
    %v229 = vpack.c.b16 %v167, %v165
    %v230 = vpack.c.b16 %v170, %v168
    %v231 = vpack.c.b16 %v171, %v169
    %v232 = vpack.c.b16 %v174, %v172
    %v233 = vpack.c.b16 %v175, %v173
    %v234 = vpack.c.b16 %v178, %v176
    %v235 = vpack.c.b16 %v179, %v177
    %v236 = vpack.c.b16 %v182, %v180
    %v237 = vpack.c.b16 %v183, %v181
    %v238 = vpack.c.b16 %v186, %v184
    %v239 = vpack.c.b16 %v187, %v185
    %v240 = vpack.c.b16 %v190, %v188
    %v241 = vpack.c.b16 %v191, %v189
    %v242 = vpack.c.b16 %v194, %v192
    %v243 = vpack.c.b16 %v195, %v193
    %v244 = vpack.c.b16 %v198, %v196
    %v245 = vpack.c.b16 %v199, %v197
    %v246 = vpack.c.b16 %v202, %v200
    %v247 = vpack.c.b16 %v203, %v201
    %v248 = vpack.c.b16 %v206, %v204
    %v249 = vpack.c.b16 %v207, %v205
    %v250 = vpack.c.b16 %v210, %v208
    %v251 = vpack.c.b16 %v211, %v209
    %v252 = vpack.c.b16 %v214, %v212
    %v253 = vpack.c.b16 %v215, %v213
    %v254 = vpack.c.b16 %v218, %v216
    %v255 = vpack.c.b16 %v219, %v217
    %v256 = vpack.c.b16 %v222, %v220
    %v257 = vpack.c.b16 %v223, %v221
    %v258 = vpack.c.b16 %v226, %v224
    %v259 = vpack.c.b16 %v227, %v225
    %292 = vmatpush.bf16.msra.mxu0 %v242
    %293 = vmatpush.bf16.msra.mxu0 %v240
    %294 = vmatpush.bf16.msra.mxu0 %v238
    %295 = vmatpush.bf16.msra.mxu0 %v236
    %296 = vmatpush.bf16.msra.mxu0 %v234
    %297 = vmatpush.bf16.msra.mxu0 %v232
    %298 = vmatpush.bf16.msra.mxu0 %v230
    %299 = vmatpush.bf16.msra.mxu0 %v228
    %300 = vmatmul.bf16.gmra.mxu0 %v93
    %v301 = vpop.f32.mrf.mxu0
    %v302 = vadd.f32 %v128, %v301
    %v303 = vpop.f32.mrf.mxu0
    %304 = vdwg.mxu0
    %305 = vmatpush.bf16.msra.mxu0 %v258
    %306 = vmatpush.bf16.msra.mxu0 %v256
    %307 = vmatpush.bf16.msra.mxu0 %v254
    %308 = vmatpush.bf16.msra.mxu0 %v252
    %309 = vmatpush.bf16.msra.mxu0 %v250
    %310 = vmatpush.bf16.msra.mxu0 %v248
    %311 = vmatpush.bf16.msra.mxu0 %v246
    %312 = vmatpush.bf16.msra.mxu0 %v244
    %313 = vmatmul.bf16.gmra.mxu0 %v94
    %v314 = vpop.f32.mrf.mxu0
    %v315 = vadd.f32 %v302, %v314
    %v316 = vpop.f32.mrf.mxu0
    %317 = vdwg.mxu0
    %318 = vmatpush.bf16.msra.mxu0 %v243
    %319 = vmatpush.bf16.msra.mxu0 %v241
    %320 = vmatpush.bf16.msra.mxu0 %v239
    %321 = vmatpush.bf16.msra.mxu0 %v237
    %322 = vmatpush.bf16.msra.mxu0 %v235
    %323 = vmatpush.bf16.msra.mxu0 %v233
    %324 = vmatpush.bf16.msra.mxu0 %v231
    %325 = vmatpush.bf16.msra.mxu0 %v229
    %326 = vmatmul.bf16.gmra.mxu0 %v93
    %v327 = vpop.f32.mrf.mxu0
    %v328 = vadd.f32 %v129, %v327
    %v329 = vpop.f32.mrf.mxu0
    %330 = vdwg.mxu0
    %331 = vmatpush.bf16.msra.mxu0 %v259
    %332 = vmatpush.bf16.msra.mxu0 %v257
    %333 = vmatpush.bf16.msra.mxu0 %v255
    %334 = vmatpush.bf16.msra.mxu0 %v253
    %335 = vmatpush.bf16.msra.mxu0 %v251
    %336 = vmatpush.bf16.msra.mxu0 %v249
    %337 = vmatpush.bf16.msra.mxu0 %v247
    %338 = vmatpush.bf16.msra.mxu0 %v245
    %339 = vmatmul.bf16.gmra.mxu0 %v94
    %v340 = vpop.f32.mrf.mxu0
    %v341 = vadd.f32 %v328, %v340
    %v342 = vpop.f32.mrf.mxu0
    %343 = vdwg.mxu0
    %v344 = vmax.f32 %v315, 0.0
    %v345 = vmax.f32 %v341, 0.0
    %v346 = vpack.c.bf16 %v344, %v344
    %v347 = vpack.c.bf16 %v345, %v345
    %v348 = vld [vmem:[%s3] sm:$0xf]
    %v349 = vld [vmem:[%s3 + $0x4] sm:$0xf]
    %v350 = vld [vmem:[%s3 + $0x8] sm:$0xf]
    %v351 = vld [vmem:[%s3 + $0xc] sm:$0xf]
    %v352 = vld [vmem:[%s3 + $0x10] sm:$0xf]
    %v353 = vld [vmem:[%s3 + $0x14] sm:$0xf]
    %v354 = vld [vmem:[%s3 + $0x18] sm:$0xf]
    %v355 = vld [vmem:[%s3 + $0x1c] sm:$0xf]
    %v356 = vld [vmem:[%s3 + $0x20] sm:$0xf]
    %v357 = vld [vmem:[%s3 + $0x24] sm:$0xf]
    %v358 = vld [vmem:[%s3 + $0x28] sm:$0xf]
    %v359 = vld [vmem:[%s3 + $0x2c] sm:$0xf]
    %v360 = vld [vmem:[%s3 + $0x30] sm:$0xf]
    %v361 = vld [vmem:[%s3 + $0x34] sm:$0xf]
    %v362 = vld [vmem:[%s3 + $0x38] sm:$0xf]
    %v363 = vld [vmem:[%s3 + $0x3c] sm:$0xf]
    %v364 = vld [vmem:[%s3 + $0x40] sm:$0xf]
    %v365 = vld [vmem:[%s3 + $0x44] sm:$0xf]
    %v366 = vld [vmem:[%s3 + $0x48] sm:$0xf]
    %v367 = vld [vmem:[%s3 + $0x4c] sm:$0xf]
    %v368 = vld [vmem:[%s3 + $0x50] sm:$0xf]
    %v369 = vld [vmem:[%s3 + $0x54] sm:$0xf]
    %v370 = vld [vmem:[%s3 + $0x58] sm:$0xf]
    %v371 = vld [vmem:[%s3 + $0x5c] sm:$0xf]
    %v372 = vld [vmem:[%s3 + $0x60] sm:$0xf]
    %v373 = vld [vmem:[%s3 + $0x64] sm:$0xf]
    %v374 = vld [vmem:[%s3 + $0x68] sm:$0xf]
    %v375 = vld [vmem:[%s3 + $0x6c] sm:$0xf]
    %v376 = vld [vmem:[%s3 + $0x70] sm:$0xf]
    %v377 = vld [vmem:[%s3 + $0x74] sm:$0xf]
    %v378 = vld [vmem:[%s3 + $0x78] sm:$0xf]
    %v379 = vld [vmem:[%s3 + $0x7c] sm:$0xf]
    %v381 = vperm.slane %v42, 0
    %v415 = vunpack.c.l.b16 %v348
    %v416 = vunpack.c.l.b16 %v349
    %v417 = vunpack.c.l.b16 %v350
    %v418 = vunpack.c.l.b16 %v351
    %v419 = vunpack.c.l.b16 %v352
    %v420 = vunpack.c.l.b16 %v353
    %v421 = vunpack.c.l.b16 %v354
    %v422 = vunpack.c.l.b16 %v355
    %v423 = vunpack.c.l.b16 %v356
    %v424 = vunpack.c.l.b16 %v357
    %v425 = vunpack.c.l.b16 %v358
    %v426 = vunpack.c.l.b16 %v359
    %v427 = vunpack.c.l.b16 %v360
    %v428 = vunpack.c.l.b16 %v361
    %v429 = vunpack.c.l.b16 %v362
    %v430 = vunpack.c.l.b16 %v363
    %v431 = vunpack.c.l.b16 %v364
    %v432 = vunpack.c.l.b16 %v365
    %v433 = vunpack.c.l.b16 %v366
    %v434 = vunpack.c.l.b16 %v367
    %v435 = vunpack.c.l.b16 %v368
    %v436 = vunpack.c.l.b16 %v369
    %v437 = vunpack.c.l.b16 %v370
    %v438 = vunpack.c.l.b16 %v371
    %v439 = vunpack.c.l.b16 %v372
    %v440 = vunpack.c.l.b16 %v373
    %v441 = vunpack.c.l.b16 %v374
    %v442 = vunpack.c.l.b16 %v375
    %v443 = vunpack.c.l.b16 %v376
    %v444 = vunpack.c.l.b16 %v377
    %v445 = vunpack.c.l.b16 %v378
    %v446 = vunpack.c.l.b16 %v379
    %v447 = vpack.c.b16 %v416, %v415
    %v448 = vpack.c.b16 %v418, %v417
    %v449 = vpack.c.b16 %v420, %v419
    %v450 = vpack.c.b16 %v422, %v421
    %v451 = vpack.c.b16 %v424, %v423
    %v452 = vpack.c.b16 %v426, %v425
    %v453 = vpack.c.b16 %v428, %v427
    %v454 = vpack.c.b16 %v430, %v429
    %v455 = vpack.c.b16 %v432, %v431
    %v456 = vpack.c.b16 %v434, %v433
    %v457 = vpack.c.b16 %v436, %v435
    %v458 = vpack.c.b16 %v438, %v437
    %v459 = vpack.c.b16 %v440, %v439
    %v460 = vpack.c.b16 %v442, %v441
    %v461 = vpack.c.b16 %v444, %v443
    %v462 = vpack.c.b16 %v446, %v445
    %479 = vmatpush.bf16.msra.mxu0 %v454
    %480 = vmatpush.bf16.msra.mxu0 %v453
    %481 = vmatpush.bf16.msra.mxu0 %v452
    %482 = vmatpush.bf16.msra.mxu0 %v451
    %483 = vmatpush.bf16.msra.mxu0 %v450
    %484 = vmatpush.bf16.msra.mxu0 %v449
    %485 = vmatpush.bf16.msra.mxu0 %v448
    %486 = vmatpush.bf16.msra.mxu0 %v447
    %487 = vmatmul.bf16.gmra.mxu0 %v346
    %v488 = vpop.f32.mrf.mxu0
    %v489 = vadd.f32 %v381, %v488
    %v490 = vpop.f32.mrf.mxu0
    %491 = vdwg.mxu0
    %492 = vmatpush.bf16.msra.mxu0 %v462
    %493 = vmatpush.bf16.msra.mxu0 %v461
    %494 = vmatpush.bf16.msra.mxu0 %v460
    %495 = vmatpush.bf16.msra.mxu0 %v459
    %496 = vmatpush.bf16.msra.mxu0 %v458
    %497 = vmatpush.bf16.msra.mxu0 %v457
    %498 = vmatpush.bf16.msra.mxu0 %v456
    %499 = vmatpush.bf16.msra.mxu0 %v455
    %500 = vmatmul.bf16.gmra.mxu0 %v347
    %v501 = vpop.f32.mrf.mxu0
    %v502 = vadd.f32 %v489, %v501
    %v503 = vpop.f32.mrf.mxu0
    %504 = vdwg.mxu0
    %505 = vst.msk [vmem:[#allocation5] sm:$0xff] %vm54, %v502
    // Predicated region
    $region26: #{ball_ball_update_opt_net.1} parent=1 // pred_check
      _
    $region27: #{ball_ball_update_opt_net.1} parent=1 // pred_check_branch
      %507 = sbr.rel (0) target = $region29
    $region28: #{ball_ball_update_opt_net.1} parent=1 // pred_region
      %509 = vsyncadd [#allocation4], 0
      %s511 = sshll.u32 [#allocation5], 4
      %s512 = int_to_ptr.vmem [resolvable:$true] %s511
      %s513 = sshll.u32 %s5, 4
      %s514 = int_to_ptr.hbm [resolvable:$true] %s513
      %516 = dma.vmem_to_hbm [thread:$0]  %s512, 128, %s514, [#allocation4]
    $region29: #{ball_ball_update_opt_net.1} parent=1 // pred_fallthru
      _
    // Predicated region
    $region30: #{ball_ball_update_opt_net.1} parent=1 // pred_check
      _
    $region31: #{ball_ball_update_opt_net.1} parent=1 // pred_check_branch
      %518 = sbr.rel (0) target = $region33
    $region32: #{ball_ball_update_opt_net.1} parent=1 // pred_region
      %520 = dma.done [#allocation4], 128
    $region33: #{ball_ball_update_opt_net.1} parent=1 // pred_fallthru
      _
    %521 = vsyncpa [#allocation3], 1
    %522 = vsyncpa [#allocation4], 1

</llo_original>
